<compile_context>
chip_gen: v7x
topology: tpu7x:2x2x1
jax: 0.10.0
libtpu: 0.0.40
codegen_flags: <defaults>
</compile_context>

<pallas_src>
import jax
import jax.numpy as jnp
from jax import lax
from jax.experimental import pallas as pl
from jax.experimental.pallas import tpu as pltpu


def _round_up(x, m):
    return (x + m - 1) // m * m


# -----------------------------------------------------------------------------
# Pallas kernel: two MXU dots + folded-BN bias + ReLU + one unmasked store.
# -----------------------------------------------------------------------------
def _rcnn_head_kernel(x_ref, w1_ref, b1_ref, wh_ref, bh_ref, out_ref):
    # In-kernel f32 -> bf16 cast (VPU, free against the DMA); avoids a separate
    # wrapper-side cast pass over x in HBM.
    x = x_ref[...].astype(jnp.bfloat16)
    # step2: full-extent 4x4 VALID conv == (TILE_N, K) @ (K, F) matmul.
    # BN scale is pre-folded into w1; only the bias remains.
    h = jnp.dot(x, w1_ref[...], preferred_element_type=jnp.float32)
    h = jnp.maximum(h + b1_ref[...], 0.0)                     # bias + ReLU (f32)
    # Fused heads with identity block: (TILE_N, F) @ (F, 128) emits the whole
    # lane-dense [tracking_feat | cls | reg | 0] slab straight from the MXU.
    y = jnp.dot(h.astype(jnp.bfloat16), wh_ref[...],
                preferred_element_type=jnp.float32) + bh_ref[...]
    out_ref[...] = y.astype(out_ref.dtype)                    # single unmasked store


# -----------------------------------------------------------------------------
# One-time parameter folding / layout (hoisted out of the per-call path).
# -----------------------------------------------------------------------------
def prepare_head_params(params, eps=1e-5, compute_dtype=jnp.bfloat16, lane=128):
    F, C, kh, kw = params["w1"].shape
    K = C * kh * kw
    n_cls = params["wc"].shape[0]
    n_reg = params["wr"].shape[0]
    out_pad = _round_up(F + n_cls + n_reg, lane)   # lane-dense combined output width

    # Fold eval-mode BN into the step2 conv: scale into the weight, rest into a bias.
    inv_std = lax.rsqrt(params["var"] + eps)
    scale = params["gamma"] * inv_std                                   # (F,)
    w1t = (params["w1"].reshape(F, K).T * scale[None, :]).astype(compute_dtype)  # (K, F)
    bias1 = ((params["b1"] - params["mean"]) * scale
             + params["beta"]).reshape(1, F).astype(jnp.float32)

    # Fused head weight/bias: [identity (tracking feat) | box_score | box_reg | 0].
    wh = jnp.zeros((F, out_pad), jnp.float32)
    wh = wh.at[:, :F].set(jnp.eye(F, dtype=jnp.float32))
    wh = wh.at[:, F:F + n_cls].set(params["wc"].T.astype(jnp.float32))
    wh = wh.at[:, F + n_cls:F + n_cls + n_reg].set(params["wr"].T.astype(jnp.float32))
    wh = wh.astype(compute_dtype)
    bh = jnp.zeros((1, out_pad), jnp.float32)
    bh = bh.at[0, F:F + n_cls].set(params["bc"].astype(jnp.float32))
    bh = bh.at[0, F + n_cls:F + n_cls + n_reg].set(params["br"].astype(jnp.float32))

    arrays = {"w1t": w1t, "bias1": bias1, "wh": wh, "bh": bh}
    meta = {"K": K, "F": F, "n_cls": n_cls, "n_reg": n_reg,
            "out_pad": out_pad, "compute_dtype": compute_dtype}
    return arrays, meta


# -----------------------------------------------------------------------------
# N-tiling: minimal padding (sublane multiples), ~2 big steps (v7x megacore),
# capped tile size so VMEM per step stays at a few MiB with double buffering.
# -----------------------------------------------------------------------------
def _choose_tiling(n, sublane=16, target_steps=2, max_tile=2048):
    n = max(n, 1)
    n_min = _round_up(n, sublane)
    if n_min <= 4 * sublane:                  # tiny batch: one step, minimal pad
        return n_min, n_min
    steps = max(target_steps, pl.cdiv(n_min, max_tile))
    tile = _round_up(pl.cdiv(n, steps), sublane)
    n_pad = tile * steps
    return tile, n_pad


# -----------------------------------------------------------------------------
# Forward wrapper: N-tiled grid, resident weights, lane-dense bf16 output slab.
# -----------------------------------------------------------------------------
def rcnn_vargnet_head_forward(x_nchw, arrays, meta):
    N, C, H, W = x_nchw.shape
    K, F = meta["K"], meta["F"]
    n_cls, n_reg = meta["n_cls"], meta["n_reg"]
    out_pad = meta["out_pad"]
    assert C * H * W == K, "ROI feature size must match step2 kernel extent"

    tile_n, n_pad = _choose_tiling(N)
    x2d = x_nchw.reshape(N, K)                       # exact im2col of 4x4 VALID conv (f32)
    if n_pad != N:
        x2d = jnp.pad(x2d, ((0, n_pad - N), (0, 0)))

    grid = (n_pad // tile_n,)
    wdt_size = jnp.dtype(meta["compute_dtype"]).itemsize
    cost = pl.CostEstimate(
        flops=2 * n_pad * K * F + 2 * n_pad * F * out_pad,
        transcendentals=0,
        bytes_accessed=(n_pad * K * 4                         # x stream (f32)
                        + (K * F + F * out_pad) * wdt_size    # resident bf16 weights
                        + (F + out_pad) * 4                   # biases
                        + n_pad * out_pad * 2),               # bf16 output slab
    )

    out = pl.pallas_call(
        _rcnn_head_kernel,
        out_shape=jax.ShapeDtypeStruct((n_pad, out_pad), jnp.bfloat16),
        grid_spec=pltpu.PrefetchScalarGridSpec(
            num_scalar_prefetch=0,
            grid=grid,
            in_specs=[
                pl.BlockSpec((tile_n, K), lambda i: (i, 0)),      # x: streamed / pipelined
                pl.BlockSpec((K, F), lambda i: (0, 0)),           # w1 (BN-scaled): resident
                pl.BlockSpec((1, F), lambda i: (0, 0)),           # folded BN bias
                pl.BlockSpec((F, out_pad), lambda i: (0, 0)),     # fused head weight [I|cls|reg|0]
                pl.BlockSpec((1, out_pad), lambda i: (0, 0)),     # fused head bias
            ],
            out_specs=pl.BlockSpec((tile_n, out_pad), lambda i: (i, 0)),
        ),
        compiler_params=pltpu.CompilerParams(
            dimension_semantics=("parallel",)),                   # shard N across v7x TCs
        cost_estimate=cost,
    )(x2d, arrays["w1t"], arrays["bias1"], arrays["wh"], arrays["bh"])

    # Trim padded rows once, then split the disjoint column ranges of the slab.
    out = out[:N]
    feat = out[:, :F]
    cls = out[:, F:F + n_cls]
    reg = out[:, F + n_cls:F + n_cls + n_reg]
    return {
        "rcnn_cls_pred": cls.reshape(N, n_cls, 1, 1),
        "rcnn_reg_pred": reg.reshape(N, n_reg, 1, 1),
        "rcnn_tracking_feat": feat.reshape(N, F, 1, 1),
    }


# -----------------------------------------------------------------------------
# Deterministic synthetic parameters (shapes dictated by the module __init__).
# -----------------------------------------------------------------------------
def init_params(key, in_channel, pw_num_filter2, num_fg_classes,
                with_background=True, class_agnostic_reg=False,
                reg_channel_base=4, ksize=4):
    with_bg = 1 if with_background else 0
    n_cls = num_fg_classes + with_bg
    n_reg = reg_channel_base if class_agnostic_reg else n_cls * reg_channel_base
    k = jax.random.split(key, 10)
    f32 = jnp.float32
    return {
        # step2 (Conv2d + BatchNorm2d)
        "w1": 0.05 * jax.random.normal(k[0], (pw_num_filter2, in_channel, ksize, ksize), f32),
        "b1": 0.05 * jax.random.normal(k[1], (pw_num_filter2,), f32),
        "gamma": 1.0 + 0.1 * jax.random.normal(k[2], (pw_num_filter2,), f32),
        "beta": 0.1 * jax.random.normal(k[3], (pw_num_filter2,), f32),
        "mean": 0.05 * jax.random.normal(k[4], (pw_num_filter2,), f32),
        "var": 1.0 + 0.1 * jnp.abs(jax.random.normal(k[5], (pw_num_filter2,), f32)),
        # box_score (1x1 conv)
        "wc": 0.05 * jax.random.normal(k[6], (n_cls, pw_num_filter2), f32),
        "bc": 0.05 * jax.random.normal(k[7], (n_cls,), f32),
        # box_reg (1x1 conv)
        "wr": 0.05 * jax.random.normal(k[8], (n_reg, pw_num_filter2), f32),
        "br": 0.05 * jax.random.normal(k[9], (n_reg,), f32),
    }


# -----------------------------------------------------------------------------
# Pure-JAX f32 reference (NCHW convs) for the correctness check.
# -----------------------------------------------------------------------------
def reference_forward(x, p, eps=1e-5):
    dn = ("NCHW", "OIHW", "NCHW")
    y = lax.conv_general_dilated(x, p["w1"], (1, 1), "VALID", dimension_numbers=dn)
    y = y + p["b1"][None, :, None, None]
    y = (y - p["mean"][None, :, None, None]) / jnp.sqrt(p["var"][None, :, None, None] + eps)
    y = y * p["gamma"][None, :, None, None] + p["beta"][None, :, None, None]
    y = jnp.maximum(y, 0.0)
    cls = lax.conv_general_dilated(y, p["wc"][:, :, None, None], (1, 1), "VALID",
                                   dimension_numbers=dn) + p["bc"][None, :, None, None]
    reg = lax.conv_general_dilated(y, p["wr"][:, :, None, None], (1, 1), "VALID",
                                   dimension_numbers=dn) + p["br"][None, :, None, None]
    return {"rcnn_cls_pred": cls, "rcnn_reg_pred": reg, "rcnn_tracking_feat": y}


if __name__ == "__main__":
    # Small but representative shapes: enough ROIs for a 2-step grid, and not a
    # multiple of the tile so padding/slicing paths are exercised.
    in_channel = 16
    pw_num_filter2 = 32
    num_fg_classes = 3
    N_ROIS, H, W = 200, 4, 4          # 4x4 ROI features, step2 kernel_size=4

    key = jax.random.PRNGKey(0)
    key_x, key_p = jax.random.split(key)
    x = jax.random.normal(key_x, (N_ROIS, in_channel, H, W), jnp.float32)
    params = init_params(key_p, in_channel, pw_num_filter2, num_fg_classes)

    # One-time parameter folding (hoisted out of the per-call path).
    arrays, meta = prepare_head_params(params)

    out = rcnn_vargnet_head_forward(x, arrays, meta)
    out = jax.tree_util.tree_map(jax.block_until_ready, out)

    ref = reference_forward(x, params)
    for name in ("rcnn_cls_pred", "rcnn_reg_pred", "rcnn_tracking_feat"):
        assert out[name].shape == ref[name].shape, (name, out[name].shape, ref[name].shape)
        # bf16 MXU operands + bf16 output slab vs f32 reference -> ~1e-2-level deltas.
        assert jnp.allclose(out[name].astype(jnp.float32), ref[name],
                            atol=5e-2, rtol=5e-2), name

    print("KERNEL_OK")
</pallas_src>

<mosaic_0001>
module attributes {stable_mosaic.version = 11 : i64} {
  func.func @_rcnn_head_kernel(%arg0: i32, %arg1: memref<112x256xf32, #tpu.memory_space<vmem>>, %arg2: memref<256x32xbf16, #tpu.memory_space<vmem>>, %arg3: memref<1x32xf32, #tpu.memory_space<vmem>>, %arg4: memref<32x128xbf16, #tpu.memory_space<vmem>>, %arg5: memref<1x128xf32, #tpu.memory_space<vmem>>, %arg6: memref<112x128xbf16, #tpu.memory_space<vmem>>) attributes {dimension_semantics = [#tpu.dimension_semantics<parallel>], iteration_bounds = array<i64: 2>, scalar_prefetch = 0 : i64, scratch_operands = 0 : i64, tpu.core_type = #tpu.core_type<tc>, window_params = [{transform_indices = @transform_0, window_bounds = array<i64: 112, 256>}, {pipeline_mode = #tpu.pipeline_mode<synchronous>, transform_indices = @transform_1, window_bounds = array<i64: 256, 32>}, {pipeline_mode = #tpu.pipeline_mode<synchronous>, transform_indices = @transform_2, window_bounds = array<i64: 1, 32>}, {pipeline_mode = #tpu.pipeline_mode<synchronous>, transform_indices = @transform_3, window_bounds = array<i64: 32, 128>}, {pipeline_mode = #tpu.pipeline_mode<synchronous>, transform_indices = @transform_4, window_bounds = array<i64: 1, 128>}, {transform_indices = @transform_5, window_bounds = array<i64: 112, 128>}]} {
    %c0 = arith.constant 0 : index
    %c0_0 = arith.constant 0 : index
    %0 = vector.load %arg1[%c0, %c0_0] : memref<112x256xf32, #tpu.memory_space<vmem>>, vector<112x256xf32>
    %1 = arith.truncf %0 : vector<112x256xf32> to vector<112x256xbf16>
    %c0_1 = arith.constant 0 : index
    %c0_2 = arith.constant 0 : index
    %2 = vector.load %arg2[%c0_1, %c0_2] : memref<256x32xbf16, #tpu.memory_space<vmem>>, vector<256x32xbf16>
    %cst = arith.constant dense<0.000000e+00> : vector<112x32xf32>
    %3 = tpu.matmul %1, %2, %cst {dimension_numbers = #tpu.dot_dimension_numbers<[1], [0], [0], [1], [0, 0, 1, 1], [], []>} : vector<112x256xbf16>, vector<256x32xbf16>, vector<112x32xf32> -> vector<112x32xf32>
    %c0_3 = arith.constant 0 : index
    %c0_4 = arith.constant 0 : index
    %4 = vector.load %arg3[%c0_3, %c0_4] : memref<1x32xf32, #tpu.memory_space<vmem>>, vector<1x32xf32>
    %5 = vector.broadcast %4 : vector<1x32xf32> to vector<112x32xf32>
    %6 = arith.addf %3, %5 : vector<112x32xf32>
    %cst_5 = arith.constant 0.000000e+00 : f32
    %7 = vector.broadcast %cst_5 : f32 to vector<112x32xf32>
    %8 = arith.maximumf %6, %7 : vector<112x32xf32>
    %9 = arith.truncf %8 : vector<112x32xf32> to vector<112x32xbf16>
    %c0_6 = arith.constant 0 : index
    %c0_7 = arith.constant 0 : index
    %10 = vector.load %arg4[%c0_6, %c0_7] : memref<32x128xbf16, #tpu.memory_space<vmem>>, vector<32x128xbf16>
    %cst_8 = arith.constant dense<0.000000e+00> : vector<112x128xf32>
    %11 = tpu.matmul %9, %10, %cst_8 {dimension_numbers = #tpu.dot_dimension_numbers<[1], [0], [0], [1], [0, 0, 1, 1], [], []>} : vector<112x32xbf16>, vector<32x128xbf16>, vector<112x128xf32> -> vector<112x128xf32>
    %c0_9 = arith.constant 0 : index
    %c0_10 = arith.constant 0 : index
    %12 = vector.load %arg5[%c0_9, %c0_10] : memref<1x128xf32, #tpu.memory_space<vmem>>, vector<1x128xf32>
    %13 = vector.broadcast %12 : vector<1x128xf32> to vector<112x128xf32>
    %14 = arith.addf %11, %13 : vector<112x128xf32>
    %15 = arith.truncf %14 : vector<112x128xf32> to vector<112x128xbf16>
    %c0_11 = arith.constant 0 : index
    %c0_12 = arith.constant 0 : index
    %16 = vector.load %arg6[%c0_11, %c0_12] : memref<112x128xbf16, #tpu.memory_space<vmem>>, vector<112x128xbf16>
    tpu.vector_store %arg6[%c0_11, %c0_12], %15 {strides = array<i32>} : memref<112x128xbf16, #tpu.memory_space<vmem>>, vector<112x128xbf16>,
    return
  }
  func.func @transform_0(%arg0: i32) -> (i32, i32) {
    %c0_i32 = arith.constant 0 : i32
    %c0_i32_0 = arith.constant 0 : i32
    return %arg0, %c0_i32 : i32, i32
  }
  func.func @transform_1(%arg0: i32) -> (i32, i32) {
    %c0_i32 = arith.constant 0 : i32
    %c0_i32_0 = arith.constant 0 : i32
    %c0_i32_1 = arith.constant 0 : i32
    return %c0_i32, %c0_i32_0 : i32, i32
  }
  func.func @transform_2(%arg0: i32) -> (i32, i32) {
    %c0_i32 = arith.constant 0 : i32
    %c0_i32_0 = arith.constant 0 : i32
    %c0_i32_1 = arith.constant 0 : i32
    return %c0_i32, %c0_i32_0 : i32, i32
  }
  func.func @transform_3(%arg0: i32) -> (i32, i32) {
    %c0_i32 = arith.constant 0 : i32
    %c0_i32_0 = arith.constant 0 : i32
    %c0_i32_1 = arith.constant 0 : i32
    return %c0_i32, %c0_i32_0 : i32, i32
  }
  func.func @transform_4(%arg0: i32) -> (i32, i32) {
    %c0_i32 = arith.constant 0 : i32
    %c0_i32_0 = arith.constant 0 : i32
    %c0_i32_1 = arith.constant 0 : i32
    return %c0_i32, %c0_i32_0 : i32, i32
  }
  func.func @transform_5(%arg0: i32) -> (i32, i32) {
    %c0_i32 = arith.constant 0 : i32
    %c0_i32_0 = arith.constant 0 : i32
    return %arg0, %c0_i32 : i32, i32
  }
}

</mosaic_0001>

<llo_original>
// kernel: tpu_custom_call.1
$region0: #{tpu_custom_call.1}
  #allocation0 [shape = 'u32[]', space=smem, size = 0x4, offset = 0x4, fixed_abs, tag = 'smem constant byte address 0x4 - core index']
  #allocation1 [shape = 'u32[144,128]{1,0:T(1,128)}', space=vmem, size = 0x12000, scoped, tag = 'internal scratch']
  %s0 = inlined_call_operand.hbm [shape: f32[224,256], index: 0, kind: input, shape index: {}]
  %s1 = inlined_call_operand.vmem [shape: bf16[256,32], index: 1, kind: input, shape index: {}]
  %s2 = inlined_call_operand.vmem [shape: f32[1,32], index: 2, kind: input, shape index: {}]
  %s3 = inlined_call_operand.vmem [shape: bf16[32,128], index: 3, kind: input, shape index: {}]
  %s4 = inlined_call_operand.vmem [shape: f32[1,128], index: 4, kind: input, shape index: {}]
  %s5 = inlined_call_operand.hbm [shape: bf16[224,128], index: 5, kind: output, shape index: {}]
  %s6 = sld [smem:[#allocation0]]
  $region57: #{tpu_custom_call.1} parent=0
    _
  %s8 = ssub.s32 1, %s6
  %s9 = scalar_select 0, %s8, %s6
  $region1: #{tpu_custom_call.1} parent=0
    #allocation2 [shape = 'u8[229376]{0}', space=vmem, size = 0x38000, scoped, tag = 'input window, operand 0']
    #allocation3 [shape = 's32[2]{0}', space=sflag, size = 0x8, scoped, tag = 'scoped memory for tpu_custom_call.1']
    #allocation4 [shape = 's32[2]{0}', space=sflag, size = 0x8, scoped, tag = 'scoped memory for tpu_custom_call.1']
    #allocation5 [shape = 'u8[57344]{0}', space=vmem, size = 0xe000, scoped, tag = 'output window, operand 0']
    %10 = vsyncpa [#allocation3], 0
    %s11 = scalar_lea.sflag [#allocation3], 1
    %12 = vsyncpa %s11, 0
    %13 = vsyncpa [#allocation4], 0
    %s14 = scalar_lea.sflag [#allocation4], 1
    %15 = vsyncpa %s14, 0
    loop: start=0, step=1, limit=4
    $region2: #{tpu_custom_call.1} parent=1 // loop_pre_header
      _
    $region3: #{tpu_custom_call.1} parent=1 // loop_header
      %s17 = sphi 0, %s21
      %p18 = scmp.ge.s32.totalorder %s17, 4
      %s27 = sphi 0, %s29
      %s30 = sphi 0, %s27
      %s31 = sphi 0, %s30
      %s47 = sphi 0, %s31
      %s51 = sphi 0, %s51
      %s53 = sphi 0, %s51
      %s54 = sphi 0, %s53
      %s68 = sphi 0, %s54
      %s72 = sphi 0, %s72
      %s74 = sphi 0, %s72
      %s75 = sphi 0, %s74
      %s89 = sphi 0, %s75
      %s93 = sphi 0, %s93
      %s95 = sphi 0, %s93
      %s96 = sphi 0, %s95
      %s110 = sphi 0, %s96
      %s114 = sphi 0, %s114
      %s116 = sphi 0, %s114
      %s117 = sphi 0, %s116
      %s131 = sphi 0, %s117
      %s137 = sphi 0, %s139
      %s140 = sphi 0, %s137
      %s141 = sphi 0, %s140
      %s157 = sphi 0, %s141
    $region4: #{tpu_custom_call.1} parent=1 // loop_header_branch
      %20 = sbr.rel (%p18) target = $region8
    $region5: #{tpu_custom_call.1} parent=1 // loop_body
      %s22 = ssub.s32 %s17, 1
      %s23 = ssub.s32 %s17, 2
      %s24 = sadd.s32 %s17, 1
      %s25 = ssub.s32 %s17, %s24
      %p26 = scmp.eq.s32.totalorder %s25, 0
      %s28 = sadd.s32 %s27, 1
      %s29 = scalar_select %p26, %s27, %s28
      %p32 = pneg %p26
      %p33 = scmp.eq.s32.totalorder %s17, 1
      %p34 = por %p32, %p33
      %p35 = scmp.ne.s32.totalorder %s27, %s30
      %p36 = scmp.eq.s32.totalorder %s17, 0
      %p37 = por %p35, %p36
      %p38 = scmp.ne.s32.totalorder %s27, %s30
      %p39 = scmp.eq.s32.totalorder %s22, 1
      %p40 = por %p38, %p39
      %p41 = scmp.ne.s32.totalorder %s30, %s31
      %p42 = scmp.eq.s32.totalorder %s22, 0
      %p43 = por %p41, %p42
      %p44 = scmp.ne.s32.totalorder %s30, %s31
      %p45 = scmp.eq.s32.totalorder %s23, 1
      %p46 = por %p44, %p45
      %p48 = scmp.ne.s32.totalorder %s31, %s47
      %p49 = scmp.eq.s32.totalorder %s23, 0
      %p50 = por %p48, %p49
      %s52 = sadd.s32 %s51, 1
      %p55 = scmp.eq.s32.totalorder %s17, 1
      %p56 = scmp.ne.s32.totalorder %s51, %s53
      %p57 = scmp.eq.s32.totalorder %s17, 0
      %p58 = por %p56, %p57
      %p59 = scmp.ne.s32.totalorder %s51, %s53
      %p60 = scmp.eq.s32.totalorder %s22, 1
      %p61 = por %p59, %p60
      %p62 = scmp.ne.s32.totalorder %s53, %s54
      %p63 = scmp.eq.s32.totalorder %s22, 0
      %p64 = por %p62, %p63
      %p65 = scmp.ne.s32.totalorder %s53, %s54
      %p66 = scmp.eq.s32.totalorder %s23, 1
      %p67 = por %p65, %p66
      %p69 = scmp.ne.s32.totalorder %s54, %s68
      %p70 = scmp.eq.s32.totalorder %s23, 0
      %p71 = por %p69, %p70
      %s73 = sadd.s32 %s72, 1
      %p76 = scmp.eq.s32.totalorder %s17, 1
      %p77 = scmp.ne.s32.totalorder %s72, %s74
      %p78 = scmp.eq.s32.totalorder %s17, 0
      %p79 = por %p77, %p78
      %p80 = scmp.ne.s32.totalorder %s72, %s74
      %p81 = scmp.eq.s32.totalorder %s22, 1
      %p82 = por %p80, %p81
      %p83 = scmp.ne.s32.totalorder %s74, %s75
      %p84 = scmp.eq.s32.totalorder %s22, 0
      %p85 = por %p83, %p84
      %p86 = scmp.ne.s32.totalorder %s74, %s75
      %p87 = scmp.eq.s32.totalorder %s23, 1
      %p88 = por %p86, %p87
      %p90 = scmp.ne.s32.totalorder %s75, %s89
      %p91 = scmp.eq.s32.totalorder %s23, 0
      %p92 = por %p90, %p91
      %s94 = sadd.s32 %s93, 1
      %p97 = scmp.eq.s32.totalorder %s17, 1
      %p98 = scmp.ne.s32.totalorder %s93, %s95
      %p99 = scmp.eq.s32.totalorder %s17, 0
      %p100 = por %p98, %p99
      %p101 = scmp.ne.s32.totalorder %s93, %s95
      %p102 = scmp.eq.s32.totalorder %s22, 1
      %p103 = por %p101, %p102
      %p104 = scmp.ne.s32.totalorder %s95, %s96
      %p105 = scmp.eq.s32.totalorder %s22, 0
      %p106 = por %p104, %p105
      %p107 = scmp.ne.s32.totalorder %s95, %s96
      %p108 = scmp.eq.s32.totalorder %s23, 1
      %p109 = por %p107, %p108
      %p111 = scmp.ne.s32.totalorder %s96, %s110
      %p112 = scmp.eq.s32.totalorder %s23, 0
      %p113 = por %p111, %p112
      %s115 = sadd.s32 %s114, 1
      %p118 = scmp.eq.s32.totalorder %s17, 1
      %p119 = scmp.ne.s32.totalorder %s114, %s116
      %p120 = scmp.eq.s32.totalorder %s17, 0
      %p121 = por %p119, %p120
      %p122 = scmp.ne.s32.totalorder %s114, %s116
      %p123 = scmp.eq.s32.totalorder %s22, 1
      %p124 = por %p122, %p123
      %p125 = scmp.ne.s32.totalorder %s116, %s117
      %p126 = scmp.eq.s32.totalorder %s22, 0
      %p127 = por %p125, %p126
      %p128 = scmp.ne.s32.totalorder %s116, %s117
      %p129 = scmp.eq.s32.totalorder %s23, 1
      %p130 = por %p128, %p129
      %p132 = scmp.ne.s32.totalorder %s117, %s131
      %p133 = scmp.eq.s32.totalorder %s23, 0
      %p134 = por %p132, %p133
      %s135 = ssub.s32 %s17, %s24
      %p136 = scmp.eq.s32.totalorder %s135, 0
      %s138 = sadd.s32 %s137, 1
      %s139 = scalar_select %p136, %s137, %s138
      %p142 = pneg %p136
      %p143 = scmp.eq.s32.totalorder %s17, 1
      %p144 = por %p142, %p143
      %p145 = scmp.ne.s32.totalorder %s137, %s140
      %p146 = scmp.eq.s32.totalorder %s17, 0
      %p147 = por %p145, %p146
      %p148 = scmp.ne.s32.totalorder %s137, %s140
      %p149 = scmp.eq.s32.totalorder %s22, 1
      %p150 = por %p148, %p149
      %p151 = scmp.ne.s32.totalorder %s140, %s141
      %p152 = scmp.eq.s32.totalorder %s22, 0
      %p153 = por %p151, %p152
      %p154 = scmp.ne.s32.totalorder %s140, %s141
      %p155 = scmp.eq.s32.totalorder %s23, 1
      %p156 = por %p154, %p155
      %p158 = scmp.ne.s32.totalorder %s141, %s157
      %p159 = scmp.eq.s32.totalorder %s23, 0
      %p160 = por %p158, %p159
      %p161 = scmp.le.s32.totalorder 1, %s17
      %p162 = scmp.lt.s32.totalorder %s17, 3
      %p163 = pnand %p161, %p162
      %p164 = pneg %p163
      // Predicated region
      $region9: #{tpu_custom_call.1} parent=5 // pred_check
        _
      $region10: #{tpu_custom_call.1} parent=5 // pred_check_branch
        %166 = sbr.rel (%p163) target = $region12
      $region11: #{tpu_custom_call.1} parent=5 // pred_region
        %s167 = ssub.s32 %s17, 1
        // Predicated region
        $region13: #{tpu_custom_call.1} parent=11 // pred_check
          %p168 = pneg %p64
        $region14: #{tpu_custom_call.1} parent=11 // pred_check_branch
          %170 = sbr.rel (%p168) target = $region16
        $region15: #{tpu_custom_call.1} parent=11 // pred_region
          _
        $region16: #{tpu_custom_call.1} parent=11 // pred_fallthru
          _
        // Predicated region
        $region17: #{tpu_custom_call.1} parent=11 // pred_check
          %p171 = pneg %p85
        $region18: #{tpu_custom_call.1} parent=11 // pred_check_branch
          %173 = sbr.rel (%p171) target = $region20
        $region19: #{tpu_custom_call.1} parent=11 // pred_region
          _
        $region20: #{tpu_custom_call.1} parent=11 // pred_fallthru
          _
        // Predicated region
        $region21: #{tpu_custom_call.1} parent=11 // pred_check
          %p174 = pneg %p106
        $region22: #{tpu_custom_call.1} parent=11 // pred_check_branch
          %176 = sbr.rel (%p174) target = $region24
        $region23: #{tpu_custom_call.1} parent=11 // pred_region
          _
        $region24: #{tpu_custom_call.1} parent=11 // pred_fallthru
          _
        // Predicated region
        $region25: #{tpu_custom_call.1} parent=11 // pred_check
          %p177 = pneg %p127
        $region26: #{tpu_custom_call.1} parent=11 // pred_check_branch
          %179 = sbr.rel (%p177) target = $region28
        $region27: #{tpu_custom_call.1} parent=11 // pred_region
          _
        $region28: #{tpu_custom_call.1} parent=11 // pred_fallthru
          _
      $region12: #{tpu_custom_call.1} parent=5 // pred_fallthru
        _
      %p180 = scmp.lt.s32.totalorder %s17, 2
      // Predicated region
      $region29: #{tpu_custom_call.1} parent=5 // pred_check
        %p181 = pneg %p180
      $region30: #{tpu_custom_call.1} parent=5 // pred_check_branch
        %183 = sbr.rel (%p181) target = $region32
      $region31: #{tpu_custom_call.1} parent=5 // pred_region
        // Predicated region
        $region33: #{tpu_custom_call.1} parent=31 // pred_check
          %p184 = pneg %p37
        $region34: #{tpu_custom_call.1} parent=31 // pred_check_branch
          %186 = sbr.rel (%p184) target = $region36
        $region35: #{tpu_custom_call.1} parent=31 // pred_region
          %s187 = sand.u32 %s27, 1
          %s188 = scalar_lea.sflag [#allocation3], %s187
          %s189 = sand.u32 %s27, 1
          %s190 = smul.addr %s189, 224
          %s191 = scalar_lea.vmem [#allocation2], %s190
          %s192 = smul.u32 14, %s17
          %s194 = ssub.s32 3584, 3584
          %195 = vsyncadd %s188, %s194
          %s196 = smul.addr %s192, 2
          %s197 = smul.addr %s196, 128
          %s198 = scalar_lea.hbm %s0, %s197
          %s199 = sshll.u32 %s191, 4
          %s200 = int_to_ptr.vmem [resolvable:$true] %s199
          %205 = dma.hbm_to_vmem [thread:$0]  %s198, 3584, %s200, %s188, 256, 256, 16
        $region36: #{tpu_custom_call.1} parent=31 // pred_fallthru
          _
      $region32: #{tpu_custom_call.1} parent=5 // pred_fallthru
        _
      %p206 = scmp.le.s32.totalorder 1, %s17
      %p207 = scmp.lt.s32.totalorder %s17, 3
      %p208 = pnand %p206, %p207
      %p209 = pneg %p208
      // Predicated region
      $region37: #{tpu_custom_call.1} parent=5 // pred_check
        _
      $region38: #{tpu_custom_call.1} parent=5 // pred_check_branch
        %211 = sbr.rel (%p208) target = $region40
      $region39: #{tpu_custom_call.1} parent=5 // pred_region
        %s212 = ssub.s32 %s17, 1
        %s213 = sand.u32 %s30, 1
        %s214 = scalar_lea.sflag [#allocation3], %s213
        %s215 = sand.u32 %s30, 1
        %s216 = smul.addr %s215, 224
        %s217 = scalar_lea.vmem [#allocation2], %s216
        // Predicated region
        $region41: #{tpu_custom_call.1} parent=39 // pred_check
          %p218 = pneg %p43
        $region42: #{tpu_custom_call.1} parent=39 // pred_check_branch
          %220 = sbr.rel (%p218) target = $region44
        $region43: #{tpu_custom_call.1} parent=39 // pred_region
          %221 = dma.done %s214, 3584
        $region44: #{tpu_custom_call.1} parent=39 // pred_fallthru
          _
        %s222 = sand.u32 %s30, 1
        %s223 = scalar_lea.sflag [#allocation3], %s222
        %s224 = sand.u32 %s30, 1
        %s225 = smul.addr %s224, 224
        %s226 = scalar_lea.vmem [#allocation2], %s225
        %p227 = pneg %p43
        %p228 = pneg %p40
        %p229 = pneg %p64
        %p230 = pneg %p61
        %p231 = pneg %p85
        %p232 = pneg %p82
        %p233 = pneg %p106
        %p234 = pneg %p103
        %p235 = pneg %p127
        %p236 = pneg %p124
        %p237 = pneg %p153
        %p238 = pneg %p150
        %s239 = sand.u32 %s140, 1
        %s240 = scalar_lea.sflag [#allocation4], %s239
        %s241 = sand.u32 %s140, 1
        %s242 = smul.addr %s241, 56
        %s243 = scalar_lea.vmem [#allocation5], %s242
        %s244 = smul.u32 14, %s22
        %s245 = smul.u32 14, %s22
        %v247 = vld [vmem:[%s217] sm:$0xff]
        %v248 = vld [vmem:[%s217 + $0x8] sm:$0xff]
        %v249 = vld [vmem:[%s217 + $0x10] sm:$0xff]
        %v250 = vld [vmem:[%s217 + $0x18] sm:$0xff]
        %v251 = vld [vmem:[%s217 + $0x20] sm:$0xff]
        %v252 = vld [vmem:[%s217 + $0x28] sm:$0xff]
        %v253 = vld [vmem:[%s217 + $0x30] sm:$0xff]
        %v254 = vld [vmem:[%s217 + $0x38] sm:$0xff]
        %v255 = vld [vmem:[%s217 + $0x40] sm:$0xff]
        %v256 = vld [vmem:[%s217 + $0x48] sm:$0xff]
        %v257 = vld [vmem:[%s217 + $0x50] sm:$0xff]
        %v258 = vld [vmem:[%s217 + $0x58] sm:$0xff]
        %v259 = vld [vmem:[%s217 + $0x60] sm:$0xff]
        %v260 = vld [vmem:[%s217 + $0x68] sm:$0xff]
        %v261 = vld [vmem:[%s217 + $0x70] sm:$0xff]
        %v262 = vld [vmem:[%s217 + $0x78] sm:$0xff]
        %v263 = vld [vmem:[%s217 + $0x80] sm:$0xff]
        %v264 = vld [vmem:[%s217 + $0x88] sm:$0xff]
        %v265 = vld [vmem:[%s217 + $0x90] sm:$0xff]
        %v266 = vld [vmem:[%s217 + $0x98] sm:$0xff]
        %v267 = vld [vmem:[%s217 + $0xa0] sm:$0xff]
        %v268 = vld [vmem:[%s217 + $0xa8] sm:$0xff]
        %v269 = vld [vmem:[%s217 + $0xb0] sm:$0xff]
        %v270 = vld [vmem:[%s217 + $0xb8] sm:$0xff]
        %v271 = vld [vmem:[%s217 + $0xc0] sm:$0xff]
        %v272 = vld [vmem:[%s217 + $0xc8] sm:$0xff]
        %v273 = vld [vmem:[%s217 + $0xd0] sm:$0xff]
        %v274 = vld [vmem:[%s217 + $0xd8] sm:$0xff]
        %v275 = vpack.c.bf16 %v249, %v247
        %v276 = vpack.c.bf16 %v250, %v248
        %v277 = vpack.c.bf16 %v253, %v251
        %v278 = vpack.c.bf16 %v254, %v252
        %v279 = vpack.c.bf16 %v257, %v255
        %v280 = vpack.c.bf16 %v258, %v256
        %v281 = vpack.c.bf16 %v261, %v259
        %v282 = vpack.c.bf16 %v262, %v260
        %v283 = vpack.c.bf16 %v265, %v263
        %v284 = vpack.c.bf16 %v266, %v264
        %v285 = vpack.c.bf16 %v269, %v267
        %v286 = vpack.c.bf16 %v270, %v268
        %v287 = vpack.c.bf16 %v273, %v271
        %v288 = vpack.c.bf16 %v274, %v272
        %v289 = vld [vmem:[%s1] sm:$0xf]
        %v290 = vld [vmem:[%s1 + $0x4] sm:$0xf]
        %v291 = vld [vmem:[%s1 + $0x8] sm:$0xf]
        %v292 = vld [vmem:[%s1 + $0xc] sm:$0xf]
        %v293 = vld [vmem:[%s1 + $0x10] sm:$0xf]
        %v294 = vld [vmem:[%s1 + $0x14] sm:$0xf]
        %v295 = vld [vmem:[%s1 + $0x18] sm:$0xf]
        %v296 = vld [vmem:[%s1 + $0x1c] sm:$0xf]
        %v297 = vld [vmem:[%s1 + $0x20] sm:$0xf]
        %v298 = vld [vmem:[%s1 + $0x24] sm:$0xf]
        %v299 = vld [vmem:[%s1 + $0x28] sm:$0xf]
        %v300 = vld [vmem:[%s1 + $0x2c] sm:$0xf]
        %v301 = vld [vmem:[%s1 + $0x30] sm:$0xf]
        %v302 = vld [vmem:[%s1 + $0x34] sm:$0xf]
        %v303 = vld [vmem:[%s1 + $0x38] sm:$0xf]
        %v304 = vld [vmem:[%s1 + $0x3c] sm:$0xf]
        %v305 = vld [vmem:[%s1 + $0x40] sm:$0xf]
        %v306 = vld [vmem:[%s1 + $0x44] sm:$0xf]
        %v307 = vld [vmem:[%s1 + $0x48] sm:$0xf]
        %v308 = vld [vmem:[%s1 + $0x4c] sm:$0xf]
        %v309 = vld [vmem:[%s1 + $0x50] sm:$0xf]
        %v310 = vld [vmem:[%s1 + $0x54] sm:$0xf]
        %v311 = vld [vmem:[%s1 + $0x58] sm:$0xf]
        %v312 = vld [vmem:[%s1 + $0x5c] sm:$0xf]
        %v313 = vld [vmem:[%s1 + $0x60] sm:$0xf]
        %v314 = vld [vmem:[%s1 + $0x64] sm:$0xf]
        %v315 = vld [vmem:[%s1 + $0x68] sm:$0xf]
        %v316 = vld [vmem:[%s1 + $0x6c] sm:$0xf]
        %v317 = vld [vmem:[%s1 + $0x70] sm:$0xf]
        %v318 = vld [vmem:[%s1 + $0x74] sm:$0xf]
        %v319 = vld [vmem:[%s1 + $0x78] sm:$0xf]
        %v320 = vld [vmem:[%s1 + $0x7c] sm:$0xf]
        %v321 = vld [vmem:[%s2] sm:$0x1]
        %v323 = vlaneseq
        %v324 = vshrl.u32 %v323, 7
        %v325 = vsub.s32 0, %v324
        %v326 = vrot.slane %v321, %v325
        %v360 = vunpack.c.l.b16 %v289
        %v361 = vunpack.c.l.b16 %v290
        %v362 = vunpack.c.l.b16 %v291
        %v363 = vunpack.c.l.b16 %v292
        %v364 = vunpack.c.l.b16 %v293
        %v365 = vunpack.c.l.b16 %v294
        %v366 = vunpack.c.l.b16 %v295
        %v367 = vunpack.c.l.b16 %v296
        %v368 = vunpack.c.l.b16 %v297
        %v369 = vunpack.c.l.b16 %v298
        %v370 = vunpack.c.l.b16 %v299
        %v371 = vunpack.c.l.b16 %v300
        %v372 = vunpack.c.l.b16 %v301
        %v373 = vunpack.c.l.b16 %v302
        %v374 = vunpack.c.l.b16 %v303
        %v375 = vunpack.c.l.b16 %v304
        %v376 = vunpack.c.l.b16 %v305
        %v377 = vunpack.c.l.b16 %v306
        %v378 = vunpack.c.l.b16 %v307
        %v379 = vunpack.c.l.b16 %v308
        %v380 = vunpack.c.l.b16 %v309
        %v381 = vunpack.c.l.b16 %v310
        %v382 = vunpack.c.l.b16 %v311
        %v383 = vunpack.c.l.b16 %v312
        %v384 = vunpack.c.l.b16 %v313
        %v385 = vunpack.c.l.b16 %v314
        %v386 = vunpack.c.l.b16 %v315
        %v387 = vunpack.c.l.b16 %v316
        %v388 = vunpack.c.l.b16 %v317
        %v389 = vunpack.c.l.b16 %v318
        %v390 = vunpack.c.l.b16 %v319
        %v391 = vunpack.c.l.b16 %v320
        %v392 = vpack.c.b16 %v361, %v360
        %v393 = vpack.c.b16 %v363, %v362
        %v394 = vpack.c.b16 %v365, %v364
        %v395 = vpack.c.b16 %v367, %v366
        %v396 = vpack.c.b16 %v369, %v368
        %v397 = vpack.c.b16 %v371, %v370
        %v398 = vpack.c.b16 %v373, %v372
        %v399 = vpack.c.b16 %v375, %v374
        %v400 = vpack.c.b16 %v377, %v376
        %v401 = vpack.c.b16 %v379, %v378
        %v402 = vpack.c.b16 %v381, %v380
        %v403 = vpack.c.b16 %v383, %v382
        %v404 = vpack.c.b16 %v385, %v384
        %v405 = vpack.c.b16 %v387, %v386
        %v406 = vpack.c.b16 %v389, %v388
        %v407 = vpack.c.b16 %v391, %v390
        %424 = vmatprep.subr.bf16.mxu0 0
        %425 = vmatpush1.bf16.msra.mxu0 %v392
        %426 = vmatprep.subr.bf16.mxu0 0
        %427 = vmatpush1.bf16.msra.mxu0 %v393
        %428 = vmatprep.subr.bf16.mxu0 0
        %429 = vmatpush1.bf16.msra.mxu0 %v394
        %430 = vmatprep.subr.bf16.mxu0 0
        %431 = vmatpush1.bf16.msra.mxu0 %v395
        %432 = vmatprep.subr.bf16.mxu0 0
        %433 = vmatpush1.bf16.msra.mxu0 %v396
        %434 = vmatprep.subr.bf16.mxu0 0
        %435 = vmatpush1.bf16.msra.mxu0 %v397
        %436 = vmatprep.subr.bf16.mxu0 0
        %437 = vmatpush1.bf16.msra.mxu0 %v398
        %438 = vmatprep.subr.bf16.mxu0 0
        %439 = vmatpush1.bf16.msra.mxu0 %v399
        %440 = vmatprep.subr.bf16.mxu0 0
        %441 = vmatpush1.bf16.msra.mxu0 %v400
        %442 = vmatprep.subr.bf16.mxu0 0
        %443 = vmatpush1.bf16.msra.mxu0 %v401
        %444 = vmatprep.subr.bf16.mxu0 0
        %445 = vmatpush1.bf16.msra.mxu0 %v402
        %446 = vmatprep.subr.bf16.mxu0 0
        %447 = vmatpush1.bf16.msra.mxu0 %v403
        %448 = vmatprep.subr.bf16.mxu0 0
        %449 = vmatpush1.bf16.msra.mxu0 %v404
        %450 = vmatprep.subr.bf16.mxu0 0
        %451 = vmatpush1.bf16.msra.mxu0 %v405
        %452 = vmatprep.subr.bf16.mxu0 0
        %453 = vmatpush1.bf16.msra.mxu0 %v406
        %454 = vmatprep.subr.bf16.mxu0 0
        %455 = vmatpush1.bf16.msra.mxu0 %v407
        %456 = vmatprep.mubr.bf16.mxu0 %v276
        %457 = vmatmul.mubr.bf16.gmra.mrb[0].mxu0 %v275
        %v458 = vpop.f32.mrb[0].mxu0
        %v459 = vadd.f32 %v326, %v458
        %v460 = vpop.f32.mrb[0].mxu0
        %v461 = vpop.f32.mrb[0].mxu0
        %v462 = vadd.f32 %v326, %v461
        %v463 = vpop.f32.mrb[0].mxu0
        %464 = vmatprep.mubr.bf16.mxu0 %v278
        %465 = vmatmul.mubr.bf16.gmra.mrb[0].mxu0 %v277
        %v466 = vpop.f32.mrb[0].mxu0
        %v467 = vadd.f32 %v326, %v466
        %v468 = vpop.f32.mrb[0].mxu0
        %v469 = vpop.f32.mrb[0].mxu0
        %v470 = vadd.f32 %v326, %v469
        %v471 = vpop.f32.mrb[0].mxu0
        %472 = vmatprep.mubr.bf16.mxu0 %v280
        %473 = vmatmul.mubr.bf16.gmra.mrb[0].mxu0 %v279
        %v474 = vpop.f32.mrb[0].mxu0
        %v475 = vadd.f32 %v326, %v474
        %v476 = vpop.f32.mrb[0].mxu0
        %v477 = vpop.f32.mrb[0].mxu0
        %v478 = vadd.f32 %v326, %v477
        %v479 = vpop.f32.mrb[0].mxu0
        %480 = vmatprep.mubr.bf16.mxu0 %v282
        %481 = vmatmul.mubr.bf16.gmra.mrb[0].mxu0 %v281
        %v482 = vpop.f32.mrb[0].mxu0
        %v483 = vadd.f32 %v326, %v482
        %v484 = vpop.f32.mrb[0].mxu0
        %v485 = vpop.f32.mrb[0].mxu0
        %v486 = vadd.f32 %v326, %v485
        %v487 = vpop.f32.mrb[0].mxu0
        %488 = vmatprep.mubr.bf16.mxu0 %v284
        %489 = vmatmul.mubr.bf16.gmra.mrb[0].mxu0 %v283
        %v490 = vpop.f32.mrb[0].mxu0
        %v491 = vadd.f32 %v326, %v490
        %v492 = vpop.f32.mrb[0].mxu0
        %v493 = vpop.f32.mrb[0].mxu0
        %v494 = vadd.f32 %v326, %v493
        %v495 = vpop.f32.mrb[0].mxu0
        %496 = vmatprep.mubr.bf16.mxu0 %v286
        %497 = vmatmul.mubr.bf16.gmra.mrb[0].mxu0 %v285
        %v498 = vpop.f32.mrb[0].mxu0
        %v499 = vadd.f32 %v326, %v498
        %v500 = vpop.f32.mrb[0].mxu0
        %v501 = vpop.f32.mrb[0].mxu0
        %v502 = vadd.f32 %v326, %v501
        %v503 = vpop.f32.mrb[0].mxu0
        %504 = vmatprep.mubr.bf16.mxu0 %v288
        %505 = vmatmul.mubr.bf16.gmra.mrb[0].mxu0 %v287
        %v506 = vpop.f32.mrb[0].mxu0
        %v507 = vadd.f32 %v326, %v506
        %v508 = vpop.f32.mrb[0].mxu0
        %v509 = vpop.f32.mrb[0].mxu0
        %v510 = vadd.f32 %v326, %v509
        %v511 = vpop.f32.mrb[0].mxu0
        %512 = vdwg.mxu0
        %v513 = vmax.f32 %v459, 0.0
        %v514 = vmax.f32 %v462, 0.0
        %v515 = vmax.f32 %v467, 0.0
        %v516 = vmax.f32 %v470, 0.0
        %v517 = vmax.f32 %v475, 0.0
        %v518 = vmax.f32 %v478, 0.0
        %v519 = vmax.f32 %v483, 0.0
        %v520 = vmax.f32 %v486, 0.0
        %v521 = vmax.f32 %v491, 0.0
        %v522 = vmax.f32 %v494, 0.0
        %v523 = vmax.f32 %v499, 0.0
        %v524 = vmax.f32 %v502, 0.0
        %v525 = vmax.f32 %v507, 0.0
        %v526 = vmax.f32 %v510, 0.0
        %v527 = vpack.c.bf16 %v514, %v513
        %v528 = vpack.c.bf16 %v516, %v515
        %v529 = vpack.c.bf16 %v518, %v517
        %v530 = vpack.c.bf16 %v520, %v519
        %v531 = vpack.c.bf16 %v522, %v521
        %v532 = vpack.c.bf16 %v524, %v523
        %v533 = vpack.c.bf16 %v526, %v525
        %v534 = vld [vmem:[%s3] sm:$0xf]
        %v535 = vld [vmem:[%s3 + $0x4] sm:$0xf]
        %v536 = vld [vmem:[%s3 + $0x8] sm:$0xf]
        %v537 = vld [vmem:[%s3 + $0xc] sm:$0xf]
        %v538 = vld [vmem:[%s4] sm:$0x1]
        %v540 = vlaneseq
        %v541 = vshrl.u32 %v540, 7
        %v542 = vsub.s32 0, %v541
        %v543 = vrot.slane %v538, %v542
        %v549 = vunpack.c.l.b16 %v534
        %v550 = vunpack.c.l.b16 %v535
        %v551 = vunpack.c.l.b16 %v536
        %v552 = vunpack.c.l.b16 %v537
        %v553 = vpack.c.b16 %v550, %v549
        %v554 = vpack.c.b16 %v552, %v551
        %vm557 = vcmask 261120
        %v559 = vsel %vm557, %v527, 0
        %v562 = vsel %vm557, %v528, 0
        %v565 = vsel %vm557, %v529, 0
        %v568 = vsel %vm557, %v530, 0
        %v571 = vsel %vm557, %v531, 0
        %v574 = vsel %vm557, %v532, 0
        %v577 = vsel %vm557, %v533, 0
        %579 = vmatprep.subr.bf16.mxu0 0
        %580 = vmatpush1.bf16.msra.mxu0 %v553
        %581 = vmatprep.subr.bf16.mxu0 0
        %582 = vmatpush1.bf16.msra.mxu0 %v554
        %583 = vmatprep.subr.bf16.mxu0 0
        %584 = vmatpush1.bf16.msra.mxu0 0
        %585 = vmatprep.subr.bf16.mxu0 0
        %586 = vmatpush1.bf16.msra.mxu0 0
        %587 = vmatprep.subr.bf16.mxu0 0
        %588 = vmatpush1.bf16.msra.mxu0 0
        %589 = vmatprep.subr.bf16.mxu0 0
        %590 = vmatpush1.bf16.msra.mxu0 0
        %591 = vmatprep.subr.bf16.mxu0 0
        %592 = vmatpush1.bf16.msra.mxu0 0
        %593 = vmatprep.subr.bf16.mxu0 0
        %594 = vmatpush1.bf16.msra.mxu0 0
        %595 = vmatprep.subr.bf16.mxu0 0
        %596 = vmatpush1.bf16.msra.mxu0 0
        %597 = vmatprep.subr.bf16.mxu0 0
        %598 = vmatpush1.bf16.msra.mxu0 0
        %599 = vmatprep.subr.bf16.mxu0 0
        %600 = vmatpush1.bf16.msra.mxu0 0
        %601 = vmatprep.subr.bf16.mxu0 0
        %602 = vmatpush1.bf16.msra.mxu0 0
        %603 = vmatprep.subr.bf16.mxu0 0
        %604 = vmatpush1.bf16.msra.mxu0 0
        %605 = vmatprep.subr.bf16.mxu0 0
        %606 = vmatpush1.bf16.msra.mxu0 0
        %607 = vmatprep.subr.bf16.mxu0 0
        %608 = vmatpush1.bf16.msra.mxu0 0
        %609 = vmatprep.subr.bf16.mxu0 0
        %610 = vmatpush1.bf16.msra.mxu0 0
        %611 = vmatprep.mubr.bf16.mxu0 0
        %612 = vmatmul.mubr.bf16.gmra.mrb[0].mxu0 %v559
        %v613 = vpop.f32.mrb[0].mxu0
        %v614 = vadd.f32 %v543, %v613
        %v615 = vpop.f32.mrb[0].mxu0
        %v616 = vpop.f32.mrb[0].mxu0
        %v617 = vadd.f32 %v543, %v616
        %v618 = vpop.f32.mrb[0].mxu0
        %619 = vmatprep.mubr.bf16.mxu0 0
        %620 = vmatmul.mubr.bf16.gmra.mrb[0].mxu0 %v562
        %v621 = vpop.f32.mrb[0].mxu0
        %v622 = vadd.f32 %v543, %v621
        %v623 = vpop.f32.mrb[0].mxu0
        %v624 = vpop.f32.mrb[0].mxu0
        %v625 = vadd.f32 %v543, %v624
        %v626 = vpop.f32.mrb[0].mxu0
        %627 = vmatprep.mubr.bf16.mxu0 0
        %628 = vmatmul.mubr.bf16.gmra.mrb[0].mxu0 %v565
        %v629 = vpop.f32.mrb[0].mxu0
        %v630 = vadd.f32 %v543, %v629
        %v631 = vpop.f32.mrb[0].mxu0
        %v632 = vpop.f32.mrb[0].mxu0
        %v633 = vadd.f32 %v543, %v632
        %v634 = vpop.f32.mrb[0].mxu0
        %635 = vmatprep.mubr.bf16.mxu0 0
        %636 = vmatmul.mubr.bf16.gmra.mrb[0].mxu0 %v568
        %v637 = vpop.f32.mrb[0].mxu0
        %v638 = vadd.f32 %v543, %v637
        %v639 = vpop.f32.mrb[0].mxu0
        %v640 = vpop.f32.mrb[0].mxu0
        %v641 = vadd.f32 %v543, %v640
        %v642 = vpop.f32.mrb[0].mxu0
        %643 = vmatprep.mubr.bf16.mxu0 0
        %644 = vmatmul.mubr.bf16.gmra.mrb[0].mxu0 %v571
        %v645 = vpop.f32.mrb[0].mxu0
        %v646 = vadd.f32 %v543, %v645
        %v647 = vpop.f32.mrb[0].mxu0
        %v648 = vpop.f32.mrb[0].mxu0
        %v649 = vadd.f32 %v543, %v648
        %v650 = vpop.f32.mrb[0].mxu0
        %651 = vmatprep.mubr.bf16.mxu0 0
        %652 = vmatmul.mubr.bf16.gmra.mrb[0].mxu0 %v574
        %v653 = vpop.f32.mrb[0].mxu0
        %v654 = vadd.f32 %v543, %v653
        %v655 = vpop.f32.mrb[0].mxu0
        %v656 = vpop.f32.mrb[0].mxu0
        %v657 = vadd.f32 %v543, %v656
        %v658 = vpop.f32.mrb[0].mxu0
        %659 = vmatprep.mubr.bf16.mxu0 0
        %660 = vmatmul.mubr.bf16.gmra.mrb[0].mxu0 %v577
        %v661 = vpop.f32.mrb[0].mxu0
        %v662 = vadd.f32 %v543, %v661
        %v663 = vpop.f32.mrb[0].mxu0
        %v664 = vpop.f32.mrb[0].mxu0
        %v665 = vadd.f32 %v543, %v664
        %v666 = vpop.f32.mrb[0].mxu0
        %667 = vdwg.mxu0
        %v668 = vpack.c.bf16 %v617, %v614
        %v669 = vpack.c.bf16 %v625, %v622
        %v670 = vpack.c.bf16 %v633, %v630
        %v671 = vpack.c.bf16 %v641, %v638
        %v672 = vpack.c.bf16 %v649, %v646
        %v673 = vpack.c.bf16 %v657, %v654
        %v674 = vpack.c.bf16 %v665, %v662
        %v682 = vunpack.c.l.b16 %v668
        %v683 = vunpack.c.h.b16 %v668
        %v684 = vunpack.c.l.b16 %v669
        %v685 = vunpack.c.h.b16 %v669
        %v686 = vunpack.c.l.b16 %v670
        %v687 = vunpack.c.h.b16 %v670
        %v688 = vunpack.c.l.b16 %v671
        %v689 = vunpack.c.h.b16 %v671
        %v690 = vunpack.c.l.b16 %v672
        %v691 = vunpack.c.h.b16 %v672
        %v692 = vunpack.c.l.b16 %v673
        %v693 = vunpack.c.h.b16 %v673
        %v694 = vunpack.c.l.b16 %v674
        %v695 = vunpack.c.h.b16 %v674
        %v696 = vpack.c.b16 %v682, %v682
        %v697 = vpack.c.b16 %v683, %v683
        %v698 = vpack.c.b16 %v684, %v684
        %v699 = vpack.c.b16 %v685, %v685
        %v700 = vpack.c.b16 %v686, %v686
        %v701 = vpack.c.b16 %v687, %v687
        %v702 = vpack.c.b16 %v688, %v688
        %v703 = vpack.c.b16 %v689, %v689
        %v704 = vpack.c.b16 %v690, %v690
        %v705 = vpack.c.b16 %v691, %v691
        %v706 = vpack.c.b16 %v692, %v692
        %v707 = vpack.c.b16 %v693, %v693
        %v708 = vpack.c.b16 %v694, %v694
        %v709 = vpack.c.b16 %v695, %v695
        %724 = vst [vmem:[%s243] sm:$0xf] %v696
        %725 = vst [vmem:[%s243 + $0x4] sm:$0xf] %v697
        %726 = vst [vmem:[%s243 + $0x8] sm:$0xf] %v698
        %727 = vst [vmem:[%s243 + $0xc] sm:$0xf] %v699
        %728 = vst [vmem:[%s243 + $0x10] sm:$0xf] %v700
        %729 = vst [vmem:[%s243 + $0x14] sm:$0xf] %v701
        %730 = vst [vmem:[%s243 + $0x18] sm:$0xf] %v702
        %731 = vst [vmem:[%s243 + $0x1c] sm:$0xf] %v703
        %732 = vst [vmem:[%s243 + $0x20] sm:$0xf] %v704
        %733 = vst [vmem:[%s243 + $0x24] sm:$0xf] %v705
        %734 = vst [vmem:[%s243 + $0x28] sm:$0xf] %v706
        %735 = vst [vmem:[%s243 + $0x2c] sm:$0xf] %v707
        %736 = vst [vmem:[%s243 + $0x30] sm:$0xf] %v708
        %737 = vst [vmem:[%s243 + $0x34] sm:$0xf] %v709
        %s738 = sand.u32 %s140, 1
        %s739 = scalar_lea.sflag [#allocation4], %s738
        %s740 = sand.u32 %s140, 1
        %s741 = smul.addr %s740, 56
        %s742 = scalar_lea.vmem [#allocation5], %s741
        // Predicated region
        $region45: #{tpu_custom_call.1} parent=39 // pred_check
          %p743 = pneg %p150
        $region46: #{tpu_custom_call.1} parent=39 // pred_check_branch
          %745 = sbr.rel (%p743) target = $region48
        $region47: #{tpu_custom_call.1} parent=39 // pred_region
          %s746 = smul.u32 14, %s22
          %s748 = ssub.s32 896, 896
          %749 = vsyncadd %s739, %s748
          %s750 = smul.addr %s746, 64
          %s751 = scalar_lea.hbm %s5, %s750
          %s752 = sshll.u32 %s742, 4
          %s753 = int_to_ptr.vmem [resolvable:$true] %s752
          %758 = dma.vmem_to_hbm [thread:$0]  %s753, 896, %s751, %s739, 64, 64, 4
        $region48: #{tpu_custom_call.1} parent=39 // pred_fallthru
          _
      $region40: #{tpu_custom_call.1} parent=5 // pred_fallthru
        _
      %p759 = scmp.le.s32.totalorder 2, %s17
      // Predicated region
      $region49: #{tpu_custom_call.1} parent=5 // pred_check
        %p760 = pneg %p759
      $region50: #{tpu_custom_call.1} parent=5 // pred_check_branch
        %762 = sbr.rel (%p760) target = $region52
      $region51: #{tpu_custom_call.1} parent=5 // pred_region
        %s763 = ssub.s32 %s17, 2
        // Predicated region
        $region53: #{tpu_custom_call.1} parent=51 // pred_check
          %p764 = pneg %p156
        $region54: #{tpu_custom_call.1} parent=51 // pred_check_branch
          %766 = sbr.rel (%p764) target = $region56
        $region55: #{tpu_custom_call.1} parent=51 // pred_region
          %s767 = sand.u32 %s141, 1
          %s768 = scalar_lea.sflag [#allocation4], %s767
          %s769 = sand.u32 %s141, 1
          %s770 = smul.addr %s769, 56
          %s771 = scalar_lea.vmem [#allocation5], %s770
          %772 = dma.done %s768, 896
        $region56: #{tpu_custom_call.1} parent=51 // pred_fallthru
          _
      $region52: #{tpu_custom_call.1} parent=5 // pred_fallthru
        _
    $region6: #{tpu_custom_call.1} parent=1 // loop_footer
      %s21 = sadd.s32 1, %s17
    $region7: #{tpu_custom_call.1} parent=1 // loop_footer_branch
      %16 = sbr.rel target = $region3
    $region8: #{tpu_custom_call.1} parent=1 // loop_exit
      _
    %773 = vsyncpa [#allocation3], 1
    %s774 = scalar_lea.sflag [#allocation3], 1
    %775 = vsyncpa %s774, 1
    %776 = vsyncpa [#allocation4], 1
    %s777 = scalar_lea.sflag [#allocation4], 1
    %778 = vsyncpa %s777, 1

</llo_original>
